<compile_context>
chip_gen: v6e
topology: v6e:2x2x1
jax: 0.10.0
libtpu: 0.0.40
codegen_flags: <defaults>
</compile_context>

<pallas_src>
import jax
import jax.numpy as jnp
from jax.experimental import pallas as pl
from jax.experimental.pallas import tpu as pltpu


def _periodic_gram_kernel(bias_ref, xf_ref, yft_ref, o_ref):
    # bias_ref: (1,) f32 in SMEM, holds -D / sigma^2
    # xf_ref  : (tn, K_pad) row tile of the x cos/sin feature slab
    # yft_ref : (K_pad, tm) column tile of the (sigma-scaled, transposed) y slab
    # o_ref   : (tn, tm)    lane-dense output tile
    acc = jnp.dot(xf_ref[...], yft_ref[...], preferred_element_type=jnp.float32)
    # exp computed in f32 (correct on v5e/v6e/v7x); cast only on the store.
    o_ref[...] = jnp.exp(acc + bias_ref[0]).astype(o_ref.dtype)


def _round_up(a, b):
    return ((a + b - 1) // b) * b


def _fit_tile(extent, max_tile, align):
    """Aligned tile <= max_tile whose grid steps cover `extent` with minimal tail pad."""
    padded = _round_up(extent, align)
    steps = max(1, -(-extent // max_tile))               # ceil(extent / max_tile)
    tile = min(max_tile, _round_up(-(-padded // steps), align))
    return tile, _round_up(padded, tile)


def periodic_kernel(x, y, sigma, *, tn=512, tm=1024, out_dtype=None):
    """exp( sum_d(cos(2*pi*(x_i - y_j)) - 1) / sigma^2 ), shape (N, M).

    out_dtype=jnp.bfloat16 halves output HBM writeback (the binding resource on
    v5e/v6e) at ~3 significant digits; default keeps f32 parity with PyTorch.
    Tiles beyond (512, 1024) on v5e need pltpu.CompilerParams(vmem_limit_bytes=...)
    (its scoped-VMEM default is only 16 MiB).
    """
    x = jnp.asarray(x)
    y = jnp.asarray(y)
    N, D = x.shape
    M, D2 = y.shape
    assert D == D2, "feature dims of x and y must match"
    if out_dtype is None:
        out_dtype = jnp.result_type(x.dtype, y.dtype)

    two_pi = jnp.float32(2.0 * jnp.pi)
    xp = x.astype(jnp.float32) * two_pi
    yp = y.astype(jnp.float32) * two_pi
    inv = jnp.float32(1.0) / jnp.square(jnp.asarray(sigma, jnp.float32))

    # cos/sin feature slabs (K = 2D); 1/sigma^2 folded into the y side.
    xf = jnp.concatenate([jnp.cos(xp), jnp.sin(xp)], axis=1)          # (N, 2D)
    yf = jnp.concatenate([jnp.cos(yp), jnp.sin(yp)], axis=1) * inv    # (M, 2D)
    # Additive constant -D/sigma^2 goes in as a single SMEM scalar.
    bias = jnp.reshape(-jnp.float32(D) * inv, (1,))

    K = 2 * D
    K_pad = _round_up(K, 8)                               # sublane-aligned contraction

    tn_eff, N_pad = _fit_tile(N, tn, 8)                   # sublane-aligned rows
    tm_eff, M_pad = _fit_tile(M, tm, 128)                 # lane-aligned columns

    xf = jnp.pad(xf, ((0, N_pad - N), (0, K_pad - K)))              # (N_pad, K_pad)
    yft = jnp.pad(yf, ((0, M_pad - M), (0, K_pad - K))).T           # (K_pad, M_pad)

    grid = (N_pad // tn_eff, M_pad // tm_eff)

    cost = pl.CostEstimate(
        flops=2 * N_pad * M_pad * K_pad,
        transcendentals=N_pad * M_pad,
        bytes_accessed=(N_pad * K_pad + K_pad * M_pad) * 4
        + N_pad * M_pad * jnp.dtype(out_dtype).itemsize,
    )

    out = pl.pallas_call(
        _periodic_gram_kernel,
        out_shape=jax.ShapeDtypeStruct((N_pad, M_pad), out_dtype),
        grid=grid,
        in_specs=[
            pl.BlockSpec(memory_space=pltpu.MemorySpace.SMEM),      # bias scalar
            pl.BlockSpec((tn_eff, K_pad), lambda i, j: (i, 0)),     # x features
            pl.BlockSpec((K_pad, tm_eff), lambda i, j: (0, j)),     # y features^T
        ],
        out_specs=pl.BlockSpec((tn_eff, tm_eff), lambda i, j: (i, j)),
        compiler_params=pltpu.CompilerParams(
            dimension_semantics=("parallel", "parallel")),
        cost_estimate=cost,
    )(bias, xf, yft)

    return out[:N, :M]


def periodic_kernel_ref(x, y, sigma):
    diff = x[:, None, :] - y[None, :, :]
    dist_sq = jnp.sum(jnp.cos(2.0 * jnp.pi * diff) - 1.0, axis=2)
    return jnp.exp(dist_sq / (sigma ** 2))


if __name__ == "__main__":
    key = jax.random.PRNGKey(0)
    kx, ky = jax.random.split(key)

    # Small, deterministic example (non-multiples of the tile sizes to also
    # exercise the pad/slice path).
    N, M, D = 96, 80, 3
    x = jax.random.normal(kx, (N, D), dtype=jnp.float32)
    y = jax.random.normal(ky, (M, D), dtype=jnp.float32)
    sigma = jnp.float32(1.5)

    out = periodic_kernel(x, y, sigma)
    out = jax.block_until_ready(out)

    ref = periodic_kernel_ref(x, y, sigma)
    assert out.shape == (N, M)
    assert jnp.allclose(out, ref, atol=1e-5, rtol=1e-5), "mismatch vs reference"

    print("KERNEL_OK")
</pallas_src>

<mosaic_0001>
module attributes {stable_mosaic.version = 11 : i64} {
  func.func @_periodic_gram_kernel(%arg0: i32, %arg1: i32, %arg2: memref<1xf32, #tpu.memory_space<smem>>, %arg3: memref<96x8xf32, #tpu.memory_space<vmem>>, %arg4: memref<8x128xf32, #tpu.memory_space<vmem>>, %arg5: memref<96x128xf32, #tpu.memory_space<vmem>>) attributes {dimension_semantics = [#tpu.dimension_semantics<parallel>, #tpu.dimension_semantics<parallel>], iteration_bounds = array<i64: 1, 1>, scalar_prefetch = 0 : i64, scratch_operands = 0 : i64, tpu.core_type = #tpu.core_type<tc>, window_params = [{transform_indices = @transform_0, window_bounds = array<i64: 1>}, {transform_indices = @transform_1, window_bounds = array<i64: 96, 8>}, {transform_indices = @transform_2, window_bounds = array<i64: 8, 128>}, {transform_indices = @transform_3, window_bounds = array<i64: 96, 128>}]} {
    %c0 = arith.constant 0 : index
    %c0_0 = arith.constant 0 : index
    %0 = vector.load %arg3[%c0, %c0_0] : memref<96x8xf32, #tpu.memory_space<vmem>>, vector<96x8xf32>
    %c0_1 = arith.constant 0 : index
    %c0_2 = arith.constant 0 : index
    %1 = vector.load %arg4[%c0_1, %c0_2] : memref<8x128xf32, #tpu.memory_space<vmem>>, vector<8x128xf32>
    %cst = arith.constant dense<0.000000e+00> : vector<96x128xf32>
    %2 = tpu.matmul %0, %1, %cst {dimension_numbers = #tpu.dot_dimension_numbers<[1], [0], [0], [1], [0, 0, 1, 1], [], []>} : vector<96x8xf32>, vector<8x128xf32>, vector<96x128xf32> -> vector<96x128xf32>
    %c0_3 = arith.constant 0 : index
    %3 = memref.load %arg2[%c0_3] : memref<1xf32, #tpu.memory_space<smem>>
    %4 = vector.broadcast %3 : f32 to vector<96x128xf32>
    %5 = arith.addf %2, %4 : vector<96x128xf32>
    %6 = math.exp %5 : vector<96x128xf32>
    %c0_4 = arith.constant 0 : index
    %c0_5 = arith.constant 0 : index
    %7 = vector.load %arg5[%c0_4, %c0_5] : memref<96x128xf32, #tpu.memory_space<vmem>>, vector<96x128xf32>
    tpu.vector_store %arg5[%c0_4, %c0_5], %6 {strides = array<i32>} : memref<96x128xf32, #tpu.memory_space<vmem>>, vector<96x128xf32>,
    return
  }
  func.func @transform_0(%arg0: i32, %arg1: i32) -> i32 {
    %c0_i32 = arith.constant 0 : i32
    %c0_i32_0 = arith.constant 0 : i32
    return %c0_i32 : i32
  }
  func.func @transform_1(%arg0: i32, %arg1: i32) -> (i32, i32) {
    %c0_i32 = arith.constant 0 : i32
    %c0_i32_0 = arith.constant 0 : i32
    return %arg0, %c0_i32 : i32, i32
  }
  func.func @transform_2(%arg0: i32, %arg1: i32) -> (i32, i32) {
    %c0_i32 = arith.constant 0 : i32
    %c0_i32_0 = arith.constant 0 : i32
    return %c0_i32, %arg1 : i32, i32
  }
  func.func @transform_3(%arg0: i32, %arg1: i32) -> (i32, i32) {
    %c0_i32 = arith.constant 0 : i32
    return %arg0, %arg1 : i32, i32
  }
}

</mosaic_0001>

<llo_original>
// kernel: tpu_custom_call.1
$region0: #{tpu_custom_call.1}
  #allocation0 [shape = 'u32[]', space=smem, size = 0x4, offset = 0x4, fixed_abs, tag = 'smem constant byte address 0x4 - core index']
  #allocation1 [shape = 'u32[144,128]{1,0:T(1,128)}', space=vmem, size = 0x12000, scoped, tag = 'internal scratch']
  #allocation2 [shape = 'f32[1]{0:T(128)S(6)}', space=smem, size = 0x200, scoped, tag = 'scoped memory for tpu_custom_call.1']
  %s0 = inlined_call_operand.<no memory space> [shape: f32[1], index: 0, kind: input, shape index: {}]
  %s1 = inlined_call_operand.vmem [shape: f32[96,8], index: 1, kind: input, shape index: {}]
  %s2 = inlined_call_operand.vmem [shape: f32[8,128], index: 2, kind: input, shape index: {}]
  %s3 = inlined_call_operand.hbm [shape: f32[96,128], index: 3, kind: output, shape index: {}]
  %s4 = sld [smem:[#allocation0]]
  $region22: #{tpu_custom_call.1} parent=0
    _
  %s6 = ssub.s32 1, %s4
  %s7 = scalar_select 0, %s6, %s4
  %8 = sst [smem:[#allocation2]] %s0
  $region1: #{tpu_custom_call.1} parent=0
    #allocation3 [shape = 'u8[49152]{0}', space=vmem, size = 0xc000, scoped, tag = 'output window, operand 0, single buffered']
    #allocation4 [shape = 's32[1]{0}', space=sflag, size = 0x4, scoped, tag = 'scoped memory for tpu_custom_call.1']
    %9 = vsyncpa [#allocation4], 0
    // Predicated region
    $region2: #{tpu_custom_call.1} parent=1 // pred_check
      _
    $region3: #{tpu_custom_call.1} parent=1 // pred_check_branch
      %11 = sbr.rel (0) target = $region5
    $region4: #{tpu_custom_call.1} parent=1 // pred_region
      _
    $region5: #{tpu_custom_call.1} parent=1 // pred_fallthru
      _
    // Predicated region
    $region6: #{tpu_custom_call.1} parent=1 // pred_check
      _
    $region7: #{tpu_custom_call.1} parent=1 // pred_check_branch
      %13 = sbr.rel (0) target = $region9
    $region8: #{tpu_custom_call.1} parent=1 // pred_region
      _
    $region9: #{tpu_custom_call.1} parent=1 // pred_fallthru
      _
    // Predicated region
    $region10: #{tpu_custom_call.1} parent=1 // pred_check
      _
    $region11: #{tpu_custom_call.1} parent=1 // pred_check_branch
      %15 = sbr.rel (0) target = $region13
    $region12: #{tpu_custom_call.1} parent=1 // pred_region
      _
    $region13: #{tpu_custom_call.1} parent=1 // pred_fallthru
      _
    %v16 = vld [vmem:[%s1] sm:$0xff]
    %v17 = vld [vmem:[%s1 + $0x8] sm:$0xff]
    %v18 = vld [vmem:[%s1 + $0x10] sm:$0xff]
    %v19 = vld [vmem:[%s1 + $0x18] sm:$0xff]
    %v20 = vld [vmem:[%s1 + $0x20] sm:$0xff]
    %v21 = vld [vmem:[%s1 + $0x28] sm:$0xff]
    %v22 = vld [vmem:[%s1 + $0x30] sm:$0xff]
    %v23 = vld [vmem:[%s1 + $0x38] sm:$0xff]
    %v24 = vld [vmem:[%s1 + $0x40] sm:$0xff]
    %v25 = vld [vmem:[%s1 + $0x48] sm:$0xff]
    %v26 = vld [vmem:[%s1 + $0x50] sm:$0xff]
    %v27 = vld [vmem:[%s1 + $0x58] sm:$0xff]
    %v28 = vld [vmem:[%s2] sm:$0xff]
    %s29 = sld [smem:[#allocation2]]
    %v30 = vstv %s29
    %vm31 = vcmask 64512
    %v33 = vsel %vm31, %v16, 0
    %v36 = vsel %vm31, %v17, 0
    %v39 = vsel %vm31, %v18, 0
    %v42 = vsel %vm31, %v19, 0
    %v45 = vsel %vm31, %v20, 0
    %v48 = vsel %vm31, %v21, 0
    %v51 = vsel %vm31, %v22, 0
    %v54 = vsel %vm31, %v23, 0
    %v57 = vsel %vm31, %v24, 0
    %v60 = vsel %vm31, %v25, 0
    %v63 = vsel %vm31, %v26, 0
    %v66 = vsel %vm31, %v27, 0
    %68 = vmatprep.subr.mxu0 0.0
    %69 = vmatpush1.msra.mxu0 0.0
    %70 = vmatprep.subr.mxu0 0.0
    %71 = vmatpush1.msra.mxu0 0.0
    %72 = vmatprep.subr.mxu0 0.0
    %73 = vmatpush1.msra.mxu0 0.0
    %74 = vmatprep.subr.mxu0 0.0
    %75 = vmatpush1.msra.mxu0 0.0
    %76 = vmatprep.subr.mxu0 0.0
    %77 = vmatpush1.msra.mxu0 0.0
    %78 = vmatprep.subr.mxu0 0.0
    %79 = vmatpush1.msra.mxu0 0.0
    %80 = vmatprep.subr.mxu0 0.0
    %81 = vmatpush1.msra.mxu0 0.0
    %82 = vmatprep.subr.mxu0 0.0
    %83 = vmatpush1.msra.mxu0 0.0
    %84 = vmatprep.subr.mxu0 0.0
    %85 = vmatpush1.msra.mxu0 0.0
    %86 = vmatprep.subr.mxu0 0.0
    %87 = vmatpush1.msra.mxu0 0.0
    %88 = vmatprep.subr.mxu0 0.0
    %89 = vmatpush1.msra.mxu0 0.0
    %90 = vmatprep.subr.mxu0 0.0
    %91 = vmatpush1.msra.mxu0 0.0
    %92 = vmatprep.subr.mxu0 0.0
    %93 = vmatpush1.msra.mxu0 0.0
    %94 = vmatprep.subr.mxu0 0.0
    %95 = vmatpush1.msra.mxu0 0.0
    %96 = vmatprep.subr.mxu0 0.0
    %97 = vmatpush1.msra.mxu0 0.0
    %98 = vmatprep.subr.mxu0 0.0
    %99 = vmatpush1.msra.mxu0 %v28
    %100 = vmatprep.subr.mxu0 0.0
    %101 = vmatpush2.msra.mxu0 0.0
    %102 = vmatprep.subr.mxu0 0.0
    %103 = vmatpush2.msra.mxu0 0.0
    %104 = vmatprep.subr.mxu0 0.0
    %105 = vmatpush2.msra.mxu0 0.0
    %106 = vmatprep.subr.mxu0 0.0
    %107 = vmatpush2.msra.mxu0 0.0
    %108 = vmatprep.subr.mxu0 0.0
    %109 = vmatpush2.msra.mxu0 0.0
    %110 = vmatprep.subr.mxu0 0.0
    %111 = vmatpush2.msra.mxu0 0.0
    %112 = vmatprep.subr.mxu0 0.0
    %113 = vmatpush2.msra.mxu0 0.0
    %114 = vmatprep.subr.mxu0 0.0
    %115 = vmatpush2.msra.mxu0 0.0
    %116 = vmatprep.subr.mxu0 0.0
    %117 = vmatpush2.msra.mxu0 0.0
    %118 = vmatprep.subr.mxu0 0.0
    %119 = vmatpush2.msra.mxu0 0.0
    %120 = vmatprep.subr.mxu0 0.0
    %121 = vmatpush2.msra.mxu0 0.0
    %122 = vmatprep.subr.mxu0 0.0
    %123 = vmatpush2.msra.mxu0 0.0
    %124 = vmatprep.subr.mxu0 0.0
    %125 = vmatpush2.msra.mxu0 0.0
    %126 = vmatprep.subr.mxu0 0.0
    %127 = vmatpush2.msra.mxu0 0.0
    %128 = vmatprep.subr.mxu0 0.0
    %129 = vmatpush2.msra.mxu0 0.0
    %130 = vmatprep.subr.mxu0 0.0
    %131 = vmatpush2.msra.mxu0 0.0
    %132 = vmatprep.mubr.f32.mxu0 0.0
    %133 = vmatmul.mubr.f32.gmra.mxu0 %v33
    %v134 = vpop.f32.mrf.mxu0
    %v135 = vadd.f32 %v30, %v134
    %v136 = vpop.f32.mrf.mxu0
    %137 = vmatprep.mubr.f32.mxu0 0.0
    %138 = vmatmul.mubr.f32.gmra.mxu0 %v36
    %v139 = vpop.f32.mrf.mxu0
    %v140 = vadd.f32 %v30, %v139
    %v141 = vpop.f32.mrf.mxu0
    %142 = vmatprep.mubr.f32.mxu0 0.0
    %143 = vmatmul.mubr.f32.gmra.mxu0 %v39
    %v144 = vpop.f32.mrf.mxu0
    %v145 = vadd.f32 %v30, %v144
    %v146 = vpop.f32.mrf.mxu0
    %147 = vmatprep.mubr.f32.mxu0 0.0
    %148 = vmatmul.mubr.f32.gmra.mxu0 %v42
    %v149 = vpop.f32.mrf.mxu0
    %v150 = vadd.f32 %v30, %v149
    %v151 = vpop.f32.mrf.mxu0
    %152 = vmatprep.mubr.f32.mxu0 0.0
    %153 = vmatmul.mubr.f32.gmra.mxu0 %v45
    %v154 = vpop.f32.mrf.mxu0
    %v155 = vadd.f32 %v30, %v154
    %v156 = vpop.f32.mrf.mxu0
    %157 = vmatprep.mubr.f32.mxu0 0.0
    %158 = vmatmul.mubr.f32.gmra.mxu0 %v48
    %v159 = vpop.f32.mrf.mxu0
    %v160 = vadd.f32 %v30, %v159
    %v161 = vpop.f32.mrf.mxu0
    %162 = vmatprep.mubr.f32.mxu0 0.0
    %163 = vmatmul.mubr.f32.gmra.mxu0 %v51
    %v164 = vpop.f32.mrf.mxu0
    %v165 = vadd.f32 %v30, %v164
    %v166 = vpop.f32.mrf.mxu0
    %167 = vmatprep.mubr.f32.mxu0 0.0
    %168 = vmatmul.mubr.f32.gmra.mxu0 %v54
    %v169 = vpop.f32.mrf.mxu0
    %v170 = vadd.f32 %v30, %v169
    %v171 = vpop.f32.mrf.mxu0
    %172 = vmatprep.mubr.f32.mxu0 0.0
    %173 = vmatmul.mubr.f32.gmra.mxu0 %v57
    %v174 = vpop.f32.mrf.mxu0
    %v175 = vadd.f32 %v30, %v174
    %v176 = vpop.f32.mrf.mxu0
    %177 = vmatprep.mubr.f32.mxu0 0.0
    %178 = vmatmul.mubr.f32.gmra.mxu0 %v60
    %v179 = vpop.f32.mrf.mxu0
    %v180 = vadd.f32 %v30, %v179
    %v181 = vpop.f32.mrf.mxu0
    %182 = vmatprep.mubr.f32.mxu0 0.0
    %183 = vmatmul.mubr.f32.gmra.mxu0 %v63
    %v184 = vpop.f32.mrf.mxu0
    %v185 = vadd.f32 %v30, %v184
    %v186 = vpop.f32.mrf.mxu0
    %187 = vmatprep.mubr.f32.mxu0 0.0
    %188 = vmatmul.mubr.f32.gmra.mxu0 %v66
    %v189 = vpop.f32.mrf.mxu0
    %v190 = vadd.f32 %v30, %v189
    %v191 = vpop.f32.mrf.mxu0
    %192 = vdwg.mxu0
    %v193 = vmul.f32 %v135, 1.442695
    %v194 = vpow.pop %v193
    %v195 = vmul.f32 %v140, 1.442695
    %v196 = vpow.pop %v195
    %v197 = vmul.f32 %v145, 1.442695
    %v198 = vpow.pop %v197
    %v199 = vmul.f32 %v150, 1.442695
    %v200 = vpow.pop %v199
    %v201 = vmul.f32 %v155, 1.442695
    %v202 = vpow.pop %v201
    %v203 = vmul.f32 %v160, 1.442695
    %v204 = vpow.pop %v203
    %v205 = vmul.f32 %v165, 1.442695
    %v206 = vpow.pop %v205
    %v207 = vmul.f32 %v170, 1.442695
    %v208 = vpow.pop %v207
    %v209 = vmul.f32 %v175, 1.442695
    %v210 = vpow.pop %v209
    %v211 = vmul.f32 %v180, 1.442695
    %v212 = vpow.pop %v211
    %v213 = vmul.f32 %v185, 1.442695
    %v214 = vpow.pop %v213
    %v215 = vmul.f32 %v190, 1.442695
    %v216 = vpow.pop %v215
    %217 = vst [vmem:[#allocation3] sm:$0xff] %v194
    %218 = vst [vmem:[#allocation3 + $0x8] sm:$0xff] %v196
    %219 = vst [vmem:[#allocation3 + $0x10] sm:$0xff] %v198
    %220 = vst [vmem:[#allocation3 + $0x18] sm:$0xff] %v200
    %221 = vst [vmem:[#allocation3 + $0x20] sm:$0xff] %v202
    %222 = vst [vmem:[#allocation3 + $0x28] sm:$0xff] %v204
    %223 = vst [vmem:[#allocation3 + $0x30] sm:$0xff] %v206
    %224 = vst [vmem:[#allocation3 + $0x38] sm:$0xff] %v208
    %225 = vst [vmem:[#allocation3 + $0x40] sm:$0xff] %v210
    %226 = vst [vmem:[#allocation3 + $0x48] sm:$0xff] %v212
    %227 = vst [vmem:[#allocation3 + $0x50] sm:$0xff] %v214
    %228 = vst [vmem:[#allocation3 + $0x58] sm:$0xff] %v216
    // Predicated region
    $region14: #{tpu_custom_call.1} parent=1 // pred_check
      _
    $region15: #{tpu_custom_call.1} parent=1 // pred_check_branch
      %230 = sbr.rel (0) target = $region17
    $region16: #{tpu_custom_call.1} parent=1 // pred_region
      %s232 = ssub.s32 1536, 1536
      %233 = vsyncadd [#allocation4], %s232
      %s234 = sshll.u32 [#allocation3], 4
      %s235 = int_to_ptr.vmem [resolvable:$true] %s234
      %240 = dma.vmem_to_hbm [thread:$0]  %s235, 1536, %s3, [#allocation4], 128, 128, 8
    $region17: #{tpu_custom_call.1} parent=1 // pred_fallthru
      _
    // Predicated region
    $region18: #{tpu_custom_call.1} parent=1 // pred_check
      _
    $region19: #{tpu_custom_call.1} parent=1 // pred_check_branch
      %242 = sbr.rel (0) target = $region21
    $region20: #{tpu_custom_call.1} parent=1 // pred_region
      %243 = dma.done [#allocation4], 1536
    $region21: #{tpu_custom_call.1} parent=1 // pred_fallthru
      _
    %244 = vsyncpa [#allocation4], 1

</llo_original>
